<compile_context>
chip_gen: v6e
topology: v6e:2x2x1
jax: 0.10.0
libtpu: 0.0.40
codegen_flags: <defaults>
</compile_context>

<pallas_src>
import math

import jax
import jax.numpy as jnp
from jax.experimental import pallas as pl
from jax.experimental.pallas import tpu as pltpu


# --------------------------------------------------------------------------- utils

def _round_up(x, m):
    return (x + m - 1) // m * m


def _chip_vmem_limit_bytes():
    """Per-generation Mosaic scoped-VMEM limit.

    v5e/v6e (and v5p) have 128 MiB physical VMEM -> allow ~100 MiB.
    v7x has 64 MiB -> 48 MiB.  Unknown chips get the conservative number.
    """
    try:
        kind = jax.devices()[0].device_kind.lower()
    except Exception:
        kind = ""
    if "v5" in kind or "v6" in kind:
        return 100 * 1024 * 1024
    return 48 * 1024 * 1024


def _block_diag(w):
    """(nb, din_g, dout_g) -> (nb*din_g, nb*dout_g) block-diagonal matrix.

    Runs ONCE at parameter-prep time (hoisted out of the per-forward hot path)."""
    nb, din_g, dout_g = w.shape
    bd = jnp.zeros((nb * din_g, nb * dout_g), w.dtype)
    for g in range(nb):
        bd = bd.at[g * din_g:(g + 1) * din_g, g * dout_g:(g + 1) * dout_g].set(w[g])
    return bd


def _vmem_bytes(mode, d_model, d_ffn, nb, tf, tm, x_itemsize):
    """Rough VMEM working-set estimate (double-buffered tiles + h intermediate)."""
    if mode == "grouped":
        din_g, dffn_g = d_model // nb, d_ffn // nb
        row = 2 * tm * din_g * (x_itemsize + 4)       # x tile + f32 out tile
        w = 2 * 2 * din_g * dffn_g * 2                # resident per-group W1+W2 (bf16, x2 bufs)
        inter = tm * dffn_g * 6                       # h in f32 + bf16 copy
    elif mode == "resident":
        row = 2 * tm * d_model * (x_itemsize + 4)
        w = 2 * 2 * d_model * d_ffn * 2               # resident block-diag W1+W2
        inter = tm * d_ffn * 6
    else:  # "stream"
        row = 2 * tm * d_model * (x_itemsize + 4)
        w = 3 * 2 * d_model * tf * 2                  # Buffered(3) W1 and W2 tiles
        inter = tm * tf * 6
    return row + w + inter + (1 << 20)                # +1 MiB slack (biases, misc)


def _pick_tm(n_rows, target):
    """Row-tile size: multiple of 16 (bf16 sublane packing); prefer one that
    divides n_rows so no input padding / output-slice copy is needed."""
    target = max(16, target - target % 16)
    if n_rows <= target:
        return n_rows                                 # single full-extent row block
    floor = min(128, target)
    for cand in range(target, floor - 1, -16):
        if n_rows % cand == 0:
            return cand
    return target                                     # no good divisor: pad last tile


def _buffered_spec(shape, index_map, depth):
    """BlockSpec with deeper multi-buffering; degrade gracefully on older jax."""
    try:
        return pl.BlockSpec(shape, index_map, pipeline_mode=pl.Buffered(depth))
    except TypeError:
        return pl.BlockSpec(shape, index_map)


# --------------------------------------------------------------------------- kernels

def _ffn_resident_kernel(x_ref, w1_ref, b1_ref, w2_ref, b2_ref, o_ref):
    """One row tile; weights/biases fully VMEM resident (constant index_map).
    Used for both the fused block-diagonal path and the per-group path."""
    x = x_ref[...].astype(jnp.bfloat16)               # cast in-kernel (no wrapper pass)
    h = jnp.dot(x, w1_ref[...], preferred_element_type=jnp.float32)
    h = jnp.maximum(h + b1_ref[...], 0.0)             # bias + ReLU in f32
    # nn.Dropout(p=0.1) is identity in eval mode.
    # TODO(synk): training-mode dropout (pltpu.prng_random_bits) not implemented.
    y = jnp.dot(h.astype(jnp.bfloat16), w2_ref[...], preferred_element_type=jnp.float32)
    o_ref[...] = (y + b2_ref[...]).astype(o_ref.dtype)


def _ffn_stream_kernel(x_ref, w1_ref, b1_ref, w2_ref, b2_ref, o_ref):
    """(row tile i, ffn tile k): accumulate directly into the resident output
    block (no scratch); k==0 initializes it with b2, so finalize is free.
    Output dtype is the module's f32, so in-place accumulation is exact-enough."""
    k = pl.program_id(1)

    @pl.when(k == 0)
    def _():
        o_ref[...] = jnp.broadcast_to(b2_ref[...], o_ref.shape).astype(o_ref.dtype)

    x = x_ref[...].astype(jnp.bfloat16)
    h = jnp.dot(x, w1_ref[...], preferred_element_type=jnp.float32)
    h = jnp.maximum(h + b1_ref[...], 0.0)
    # TODO(synk): training-mode dropout not implemented (eval-mode identity).
    o_ref[...] += jnp.dot(h.astype(jnp.bfloat16), w2_ref[...],
                          preferred_element_type=jnp.float32).astype(o_ref.dtype)


# --------------------------------------------------------------------------- wrapper

def prepare_ffn_params(w1, b1, w2, b2, *, x_dtype=jnp.float32, tf=512, force_mode=None):
    """One-time parameter preparation (hoisted out of the per-forward hot path).

    Picks one of three execution modes based on group alignment and the target
    chip's VMEM:
      "grouped" : nb > 1 and per-group dims are lane-aligned -> true per-group
                  matmuls (one grid axis per group), no block-diag zero work.
      "resident": block-diagonal W1/W2 fully VMEM resident, one grid axis over
                  row tiles (for nb==1 the block-diag IS the plain weight).
      "stream"  : fallback for weights that don't fit: d_ffn tiles of the
                  block-diag weights streamed with Buffered(3), output-resident
                  accumulation.
    """
    nb, din_g, dffn_g = w1.shape
    d_model = nb * din_g
    d_ffn = nb * dffn_g

    vmem_limit = _chip_vmem_limit_bytes()
    budget = vmem_limit - 8 * 1024 * 1024             # headroom for Mosaic scratch
    xb = jnp.dtype(x_dtype).itemsize

    grouped_ok = (nb > 1 and din_g % 128 == 0 and dffn_g % 128 == 0)
    grouped_fits = grouped_ok and _vmem_bytes("grouped", d_model, d_ffn, nb, None, 128, xb) <= budget
    resident_fits = _vmem_bytes("resident", d_model, d_ffn, nb, None, 128, xb) <= budget

    if force_mode is not None:
        mode = force_mode
    elif grouped_fits:
        mode = "grouped"
    elif resident_fits:
        mode = "resident"
    else:
        mode = "stream"

    common = dict(nb=nb, d_model=d_model, d_ffn=d_ffn, vmem_limit=vmem_limit, tf=None)

    if mode == "grouped":
        return dict(common, mode="grouped",
                    w1=w1.astype(jnp.bfloat16),                       # (nb, din_g, dffn_g)
                    b1=b1.reshape(nb, 1, dffn_g).astype(jnp.float32),
                    w2=w2.astype(jnp.bfloat16),                       # (nb, dffn_g, din_g)
                    b2=b2.reshape(nb, 1, din_g).astype(jnp.float32))

    # Block-diagonal packing (resident or streamed).  For nb==1 this is just the
    # plain weight matrix; for small/unaligned groups the zero padding is bounded
    # by an MXU tile and fusing all groups into one matmul beats nb tiny matmuls.
    # TODO(synk): large (>=128) but non-128-aligned group dims still take this
    #             path and pay the nb-x zero-FLOP cost.
    w1_bd = _block_diag(w1).astype(jnp.bfloat16)                      # (D, F)
    w2_bd = _block_diag(w2).astype(jnp.bfloat16)                      # (F, D)
    b1_f = b1.reshape(1, d_ffn).astype(jnp.float32)
    b2_f = b2.reshape(1, d_model).astype(jnp.float32)

    if mode == "resident":
        return dict(common, mode="resident", w1=w1_bd, b1=b1_f, w2=w2_bd, b2=b2_f)

    # stream mode: pad d_ffn to a multiple of tf (exact: padded h cols are relu(0)=0).
    tf = min(tf, _round_up(d_ffn, 256))
    tf = max(256, tf - tf % 256)
    f_pad = _round_up(d_ffn, tf)
    if f_pad != d_ffn:
        w1_bd = jnp.pad(w1_bd, ((0, 0), (0, f_pad - d_ffn)))
        b1_f = jnp.pad(b1_f, ((0, 0), (0, f_pad - d_ffn)))
        w2_bd = jnp.pad(w2_bd, ((0, f_pad - d_ffn), (0, 0)))
    return dict(common, mode="stream", tf=tf, f_pad=f_pad,
                w1=w1_bd, b1=b1_f, w2=w2_bd, b2=b2_f)


def positionalwise_ffn(x, params, *, tm=None):
    """x: (S, B, D).  y = GroupLinear2(ReLU(GroupLinear1(x))), eval mode."""
    S, B, D = x.shape
    assert D == params["d_model"], "x feature dim does not match prepared params"
    mode = params["mode"]
    nb, d_ffn = params["nb"], params["d_ffn"]
    vmem_limit = params["vmem_limit"]
    budget = vmem_limit - 8 * 1024 * 1024

    N = S * B
    xf = x.reshape(N, D)                     # free reshape; dtype untouched (bf16 cast in-kernel)

    # ---- row tile selection -------------------------------------------------
    if tm is None:
        if mode == "stream":
            # weight tiles are re-streamed once per row tile -> arithmetic intensity
            # ~ tm FLOPs/byte; pick tm past the chip's ridge (v5e/v6e ~650, v7x ~310).
            tm = 512 if vmem_limit < 64 * 1024 * 1024 else 1024
        else:
            tm = 512
    tm = max(16, tm - tm % 16)
    while tm > 64 and _vmem_bytes(mode, D, d_ffn, nb, params["tf"], tm, x.dtype.itemsize) > budget:
        tm //= 2
    tm = _pick_tm(N, tm)

    n_pad = _round_up(N, tm)
    if n_pad != N:
        # Rare (only when no multiple-of-16 divisor of N <= tm exists).
        # TODO(synk): a masked last-tile store would avoid this extra HBM pass.
        xf = jnp.pad(xf, ((0, n_pad - N), (0, 0)))

    out_shape = jax.ShapeDtypeStruct((n_pad, D), x.dtype)
    args = (xf, params["w1"], params["b1"], params["w2"], params["b2"])

    if mode == "grouped":
        din_g, dffn_g = D // nb, d_ffn // nb
        grid = (nb, n_pad // tm)             # group outer -> weights fetched once per group
        out = pl.pallas_call(
            _ffn_resident_kernel,
            out_shape=out_shape,
            grid_spec=pltpu.PrefetchScalarGridSpec(
                num_scalar_prefetch=0,
                grid=grid,
                in_specs=[
                    pl.BlockSpec((tm, din_g), lambda g, i: (i, g)),               # x group cols
                    pl.BlockSpec((None, din_g, dffn_g), lambda g, i: (g, 0, 0)),  # W1[g]
                    pl.BlockSpec((None, 1, dffn_g), lambda g, i: (g, 0, 0)),      # b1[g]
                    pl.BlockSpec((None, dffn_g, din_g), lambda g, i: (g, 0, 0)),  # W2[g]
                    pl.BlockSpec((None, 1, din_g), lambda g, i: (g, 0, 0)),       # b2[g]
                ],
                out_specs=pl.BlockSpec((tm, din_g), lambda g, i: (i, g)),
            ),
            compiler_params=pltpu.CompilerParams(
                dimension_semantics=("parallel", "parallel"),
                vmem_limit_bytes=vmem_limit),
        )(*args)

    elif mode == "resident":
        F = params["w1"].shape[1]
        grid = (n_pad // tm,)
        out = pl.pallas_call(
            _ffn_resident_kernel,
            out_shape=out_shape,
            grid_spec=pltpu.PrefetchScalarGridSpec(
                num_scalar_prefetch=0,
                grid=grid,
                in_specs=[
                    pl.BlockSpec((tm, D), lambda i: (i, 0)),
                    pl.BlockSpec((D, F), lambda i: (0, 0)),    # resident: fetched once
                    pl.BlockSpec((1, F), lambda i: (0, 0)),
                    pl.BlockSpec((F, D), lambda i: (0, 0)),    # resident: fetched once
                    pl.BlockSpec((1, D), lambda i: (0, 0)),
                ],
                out_specs=pl.BlockSpec((tm, D), lambda i: (i, 0)),
            ),
            compiler_params=pltpu.CompilerParams(
                dimension_semantics=("parallel",),
                vmem_limit_bytes=vmem_limit),
        )(*args)

    else:  # "stream"
        tf, f_pad = params["tf"], params["f_pad"]
        grid = (n_pad // tm, f_pad // tf)
        out = pl.pallas_call(
            _ffn_stream_kernel,
            out_shape=out_shape,
            grid_spec=pltpu.PrefetchScalarGridSpec(
                num_scalar_prefetch=0,
                grid=grid,
                in_specs=[
                    pl.BlockSpec((tm, D), lambda i, k: (i, 0)),            # x rows (resident over k)
                    _buffered_spec((D, tf), lambda i, k: (0, k), 3),       # W1 ffn-col tile
                    pl.BlockSpec((1, tf), lambda i, k: (0, k)),            # b1 tile (tiny DMA)
                    _buffered_spec((tf, D), lambda i, k: (k, 0), 3),       # W2 ffn-row tile
                    pl.BlockSpec((1, D), lambda i, k: (0, 0)),             # b2
                ],
                out_specs=pl.BlockSpec((tm, D), lambda i, k: (i, 0)),      # output-resident acc
            ),
            compiler_params=pltpu.CompilerParams(
                dimension_semantics=("parallel", "arbitrary"),
                vmem_limit_bytes=vmem_limit),
        )(*args)

    if n_pad != N:
        out = out[:N]
    return out.reshape(S, B, D)


# --------------------------------------------------------------------------- reference

def _ref_ffn(x, w1, b1, w2, b2):
    """Pure-JAX f32 reference mirroring the PyTorch GroupLinear math."""
    S, B, D = x.shape
    nb, din_g, dffn_g = w1.shape
    xf = x.reshape(S * B, nb, din_g).transpose(1, 0, 2)          # (nb, N, din_g)
    h = jnp.einsum('gnd,gdf->gnf', xf, w1) + b1[:, None, :]      # (nb, N, dffn_g)
    h = jnp.maximum(h, 0.0)
    y = jnp.einsum('gnf,gfd->gnd', h, w2) + b2[:, None, :]       # (nb, N, din_g)
    return y.transpose(1, 0, 2).reshape(S, B, D)


# --------------------------------------------------------------------------- demo / test

if __name__ == "__main__":

    def make_case(key, S, B, D, d_ffn, nb):
        kx, k1, k2, k3, k4 = jax.random.split(key, 5)
        din_g, dffn_g = D // nb, d_ffn // nb
        x = jax.random.normal(kx, (S, B, D), dtype=jnp.float32)
        a1 = 1.0 / math.sqrt(dffn_g)
        w1 = jax.random.uniform(k1, (nb, din_g, dffn_g), jnp.float32, -a1, a1)
        b1 = jax.random.uniform(k2, (nb, dffn_g), jnp.float32, -a1, a1)
        a2 = 1.0 / math.sqrt(din_g)
        w2 = jax.random.uniform(k3, (nb, dffn_g, din_g), jnp.float32, -a2, a2)
        b2 = jax.random.uniform(k4, (nb, din_g), jnp.float32, -a2, a2)
        return x, w1, b1, w2, b2

    key = jax.random.PRNGKey(0)
    ka, kb, kc = jax.random.split(key, 3)

    # 1) small module-consistent shapes -> fused block-diag, VMEM-resident weights
    x, w1, b1, w2, b2 = make_case(ka, 8, 2, 32, 64, 2)
    params = prepare_ffn_params(w1, b1, w2, b2)          # one-time weight prep (hoisted)
    assert params["mode"] == "resident"
    y = jax.block_until_ready(positionalwise_ffn(x, params))
    assert y.shape == x.shape
    # bf16 MXU operands with f32 accumulation (intentional) => loosened tolerance.
    assert jnp.allclose(y, _ref_ffn(x, w1, b1, w2, b2), atol=5e-2, rtol=5e-2), "resident mismatch"

    # 2) lane-aligned groups -> grouped path (true per-group matmuls, no block-diag waste)
    x, w1, b1, w2, b2 = make_case(kb, 8, 2, 256, 512, 2)
    params = prepare_ffn_params(w1, b1, w2, b2)
    assert params["mode"] == "grouped"
    y = jax.block_until_ready(positionalwise_ffn(x, params))
    assert jnp.allclose(y, _ref_ffn(x, w1, b1, w2, b2), atol=5e-2, rtol=5e-2), "grouped mismatch"

    # 3) forced streaming fallback (d_ffn-tiled, b2-initialized output accumulation)
    x, w1, b1, w2, b2 = make_case(kc, 16, 2, 32, 1024, 2)
    params = prepare_ffn_params(w1, b1, w2, b2, tf=256, force_mode="stream")
    y = jax.block_until_ready(positionalwise_ffn(x, params))
    assert jnp.allclose(y, _ref_ffn(x, w1, b1, w2, b2), atol=5e-2, rtol=5e-2), "stream mismatch"

    print("KERNEL_OK")
</pallas_src>

<mosaic_0001>
module attributes {stable_mosaic.version = 11 : i64} {
  func.func @_ffn_resident_kernel(%arg0: i32, %arg1: memref<16x32xf32, #tpu.memory_space<vmem>>, %arg2: memref<32x64xbf16, #tpu.memory_space<vmem>>, %arg3: memref<1x64xf32, #tpu.memory_space<vmem>>, %arg4: memref<64x32xbf16, #tpu.memory_space<vmem>>, %arg5: memref<1x32xf32, #tpu.memory_space<vmem>>, %arg6: memref<16x32xf32, #tpu.memory_space<vmem>>) attributes {dimension_semantics = [#tpu.dimension_semantics<parallel>], iteration_bounds = array<i64: 1>, scalar_prefetch = 0 : i64, scratch_operands = 0 : i64, tpu.core_type = #tpu.core_type<tc>, window_params = [{transform_indices = @transform_0, window_bounds = array<i64: 16, 32>}, {pipeline_mode = #tpu.pipeline_mode<synchronous>, transform_indices = @transform_1, window_bounds = array<i64: 32, 64>}, {pipeline_mode = #tpu.pipeline_mode<synchronous>, transform_indices = @transform_2, window_bounds = array<i64: 1, 64>}, {pipeline_mode = #tpu.pipeline_mode<synchronous>, transform_indices = @transform_3, window_bounds = array<i64: 64, 32>}, {pipeline_mode = #tpu.pipeline_mode<synchronous>, transform_indices = @transform_4, window_bounds = array<i64: 1, 32>}, {transform_indices = @transform_5, window_bounds = array<i64: 16, 32>}]} {
    %c0 = arith.constant 0 : index
    %c0_0 = arith.constant 0 : index
    %0 = vector.load %arg1[%c0, %c0_0] : memref<16x32xf32, #tpu.memory_space<vmem>>, vector<16x32xf32>
    %1 = arith.truncf %0 : vector<16x32xf32> to vector<16x32xbf16>
    %c0_1 = arith.constant 0 : index
    %c0_2 = arith.constant 0 : index
    %2 = vector.load %arg2[%c0_1, %c0_2] : memref<32x64xbf16, #tpu.memory_space<vmem>>, vector<32x64xbf16>
    %cst = arith.constant dense<0.000000e+00> : vector<16x64xf32>
    %3 = tpu.matmul %1, %2, %cst {dimension_numbers = #tpu.dot_dimension_numbers<[1], [0], [0], [1], [0, 0, 1, 1], [], []>} : vector<16x32xbf16>, vector<32x64xbf16>, vector<16x64xf32> -> vector<16x64xf32>
    %c0_3 = arith.constant 0 : index
    %c0_4 = arith.constant 0 : index
    %4 = vector.load %arg3[%c0_3, %c0_4] : memref<1x64xf32, #tpu.memory_space<vmem>>, vector<1x64xf32>
    %5 = vector.broadcast %4 : vector<1x64xf32> to vector<16x64xf32>
    %6 = arith.addf %3, %5 : vector<16x64xf32>
    %cst_5 = arith.constant 0.000000e+00 : f32
    %7 = vector.broadcast %cst_5 : f32 to vector<16x64xf32>
    %8 = arith.maximumf %6, %7 : vector<16x64xf32>
    %9 = arith.truncf %8 : vector<16x64xf32> to vector<16x64xbf16>
    %c0_6 = arith.constant 0 : index
    %c0_7 = arith.constant 0 : index
    %10 = vector.load %arg4[%c0_6, %c0_7] : memref<64x32xbf16, #tpu.memory_space<vmem>>, vector<64x32xbf16>
    %cst_8 = arith.constant dense<0.000000e+00> : vector<16x32xf32>
    %11 = tpu.matmul %9, %10, %cst_8 {dimension_numbers = #tpu.dot_dimension_numbers<[1], [0], [0], [1], [0, 0, 1, 1], [], []>} : vector<16x64xbf16>, vector<64x32xbf16>, vector<16x32xf32> -> vector<16x32xf32>
    %c0_9 = arith.constant 0 : index
    %c0_10 = arith.constant 0 : index
    %12 = vector.load %arg5[%c0_9, %c0_10] : memref<1x32xf32, #tpu.memory_space<vmem>>, vector<1x32xf32>
    %13 = vector.broadcast %12 : vector<1x32xf32> to vector<16x32xf32>
    %14 = arith.addf %11, %13 : vector<16x32xf32>
    %c0_11 = arith.constant 0 : index
    %c0_12 = arith.constant 0 : index
    %15 = vector.load %arg6[%c0_11, %c0_12] : memref<16x32xf32, #tpu.memory_space<vmem>>, vector<16x32xf32>
    tpu.vector_store %arg6[%c0_11, %c0_12], %14 {strides = array<i32>} : memref<16x32xf32, #tpu.memory_space<vmem>>, vector<16x32xf32>,
    return
  }
  func.func @transform_0(%arg0: i32) -> (i32, i32) {
    %c0_i32 = arith.constant 0 : i32
    %c0_i32_0 = arith.constant 0 : i32
    return %arg0, %c0_i32 : i32, i32
  }
  func.func @transform_1(%arg0: i32) -> (i32, i32) {
    %c0_i32 = arith.constant 0 : i32
    %c0_i32_0 = arith.constant 0 : i32
    %c0_i32_1 = arith.constant 0 : i32
    return %c0_i32, %c0_i32_0 : i32, i32
  }
  func.func @transform_2(%arg0: i32) -> (i32, i32) {
    %c0_i32 = arith.constant 0 : i32
    %c0_i32_0 = arith.constant 0 : i32
    %c0_i32_1 = arith.constant 0 : i32
    return %c0_i32, %c0_i32_0 : i32, i32
  }
  func.func @transform_3(%arg0: i32) -> (i32, i32) {
    %c0_i32 = arith.constant 0 : i32
    %c0_i32_0 = arith.constant 0 : i32
    %c0_i32_1 = arith.constant 0 : i32
    return %c0_i32, %c0_i32_0 : i32, i32
  }
  func.func @transform_4(%arg0: i32) -> (i32, i32) {
    %c0_i32 = arith.constant 0 : i32
    %c0_i32_0 = arith.constant 0 : i32
    %c0_i32_1 = arith.constant 0 : i32
    return %c0_i32, %c0_i32_0 : i32, i32
  }
  func.func @transform_5(%arg0: i32) -> (i32, i32) {
    %c0_i32 = arith.constant 0 : i32
    %c0_i32_0 = arith.constant 0 : i32
    return %arg0, %c0_i32 : i32, i32
  }
}

</mosaic_0001>

<llo_original>
// kernel: tpu_custom_call.1
$region0: #{tpu_custom_call.1}
  #allocation0 [shape = 'u32[]', space=smem, size = 0x4, offset = 0x4, fixed_abs, tag = 'smem constant byte address 0x4 - core index']
  #allocation1 [shape = 'u32[144,128]{1,0:T(1,128)}', space=vmem, size = 0x12000, scoped, tag = 'internal scratch']
  %s0 = inlined_call_operand.vmem [shape: f32[16,32], index: 0, kind: input, shape index: {}]
  %s1 = inlined_call_operand.vmem [shape: bf16[32,64], index: 1, kind: input, shape index: {}]
  %s2 = inlined_call_operand.vmem [shape: f32[1,64], index: 2, kind: input, shape index: {}]
  %s3 = inlined_call_operand.vmem [shape: bf16[64,32], index: 3, kind: input, shape index: {}]
  %s4 = inlined_call_operand.vmem [shape: f32[1,32], index: 4, kind: input, shape index: {}]
  %s5 = inlined_call_operand.hbm [shape: f32[16,32], index: 5, kind: output, shape index: {}]
  %s6 = sld [smem:[#allocation0]]
  $region30: #{tpu_custom_call.1} parent=0
    _
  %s8 = ssub.s32 1, %s6
  %s9 = scalar_select 0, %s8, %s6
  $region1: #{tpu_custom_call.1} parent=0
    #allocation2 [shape = 'u8[8192]{0}', space=vmem, size = 0x2000, scoped, tag = 'output window, operand 0, single buffered']
    #allocation3 [shape = 's32[1]{0}', space=sflag, size = 0x4, scoped, tag = 'scoped memory for tpu_custom_call.1']
    %10 = vsyncpa [#allocation3], 0
    // Predicated region
    $region2: #{tpu_custom_call.1} parent=1 // pred_check
      _
    $region3: #{tpu_custom_call.1} parent=1 // pred_check_branch
      %12 = sbr.rel (0) target = $region5
    $region4: #{tpu_custom_call.1} parent=1 // pred_region
      _
    $region5: #{tpu_custom_call.1} parent=1 // pred_fallthru
      _
    // Predicated region
    $region6: #{tpu_custom_call.1} parent=1 // pred_check
      _
    $region7: #{tpu_custom_call.1} parent=1 // pred_check_branch
      %14 = sbr.rel (0) target = $region9
    $region8: #{tpu_custom_call.1} parent=1 // pred_region
      _
    $region9: #{tpu_custom_call.1} parent=1 // pred_fallthru
      _
    // Predicated region
    $region10: #{tpu_custom_call.1} parent=1 // pred_check
      _
    $region11: #{tpu_custom_call.1} parent=1 // pred_check_branch
      %16 = sbr.rel (0) target = $region13
    $region12: #{tpu_custom_call.1} parent=1 // pred_region
      _
    $region13: #{tpu_custom_call.1} parent=1 // pred_fallthru
      _
    // Predicated region
    $region14: #{tpu_custom_call.1} parent=1 // pred_check
      _
    $region15: #{tpu_custom_call.1} parent=1 // pred_check_branch
      %18 = sbr.rel (0) target = $region17
    $region16: #{tpu_custom_call.1} parent=1 // pred_region
      _
    $region17: #{tpu_custom_call.1} parent=1 // pred_fallthru
      _
    // Predicated region
    $region18: #{tpu_custom_call.1} parent=1 // pred_check
      _
    $region19: #{tpu_custom_call.1} parent=1 // pred_check_branch
      %20 = sbr.rel (0) target = $region21
    $region20: #{tpu_custom_call.1} parent=1 // pred_region
      _
    $region21: #{tpu_custom_call.1} parent=1 // pred_fallthru
      _
    %v22 = vld [vmem:[%s0] sm:$0xff]
    %v23 = vld [vmem:[%s0 + $0x8] sm:$0xff]
    %v24 = vpack.c.bf16 %v23, %v22
    %v25 = vld [vmem:[%s1] sm:$0xf]
    %v26 = vld [vmem:[%s1 + $0x4] sm:$0xf]
    %v27 = vld [vmem:[%s1 + $0x8] sm:$0xf]
    %v28 = vld [vmem:[%s1 + $0xc] sm:$0xf]
    %v29 = vld [vmem:[%s2] sm:$0x1]
    %v31 = vlaneseq
    %v32 = vshrl.u32 %v31, 7
    %v33 = vsub.s32 0, %v32
    %v34 = vrot.slane %v29, %v33
    %v40 = vunpack.c.l.b16 %v25
    %v41 = vunpack.c.l.b16 %v26
    %v42 = vunpack.c.l.b16 %v27
    %v43 = vunpack.c.l.b16 %v28
    %v44 = vpack.c.b16 %v41, %v40
    %v45 = vpack.c.b16 %v43, %v42
    %vm48 = vcmask 261120
    %v50 = vsel %vm48, %v24, 0
    %52 = vmatprep.subr.bf16.mxu0 0
    %53 = vmatpush1.bf16.msra.mxu0 0
    %54 = vmatprep.subr.bf16.mxu0 0
    %55 = vmatpush1.bf16.msra.mxu0 0
    %56 = vmatprep.subr.bf16.mxu0 0
    %57 = vmatpush1.bf16.msra.mxu0 0
    %58 = vmatprep.subr.bf16.mxu0 0
    %59 = vmatpush1.bf16.msra.mxu0 0
    %60 = vmatprep.subr.bf16.mxu0 0
    %61 = vmatpush1.bf16.msra.mxu0 0
    %62 = vmatprep.subr.bf16.mxu0 0
    %63 = vmatpush1.bf16.msra.mxu0 0
    %64 = vmatprep.subr.bf16.mxu0 0
    %65 = vmatpush1.bf16.msra.mxu0 %v45
    %66 = vmatprep.subr.bf16.mxu0 0
    %67 = vmatpush1.bf16.msra.mxu0 %v44
    %68 = vmatprep.subr.bf16.mxu0 0
    %69 = vmatpush2.bf16.msra.mxu0 0
    %70 = vmatprep.subr.bf16.mxu0 0
    %71 = vmatpush2.bf16.msra.mxu0 0
    %72 = vmatprep.subr.bf16.mxu0 0
    %73 = vmatpush2.bf16.msra.mxu0 0
    %74 = vmatprep.subr.bf16.mxu0 0
    %75 = vmatpush2.bf16.msra.mxu0 0
    %76 = vmatprep.subr.bf16.mxu0 0
    %77 = vmatpush2.bf16.msra.mxu0 0
    %78 = vmatprep.subr.bf16.mxu0 0
    %79 = vmatpush2.bf16.msra.mxu0 0
    %80 = vmatprep.subr.bf16.mxu0 0
    %81 = vmatpush2.bf16.msra.mxu0 0
    %82 = vmatprep.subr.bf16.mxu0 0
    %83 = vmatpush2.bf16.msra.mxu0 0
    %84 = vmatprep.mubr.bf16.mxu0 0
    %85 = vmatmul.mubr.bf16.gmra.mxu0 %v50
    %v86 = vpop.f32.mrf.mxu0
    %v87 = vadd.f32 %v34, %v86
    %v88 = vpop.f32.mrf.mxu0
    %v89 = vpop.f32.mrf.mxu0
    %v90 = vadd.f32 %v34, %v89
    %v91 = vpop.f32.mrf.mxu0
    %92 = vdwg.mxu0
    %v93 = vmax.f32 %v87, 0.0
    %v94 = vmax.f32 %v90, 0.0
    %v95 = vpack.c.bf16 %v94, %v93
    %v96 = vld [vmem:[%s3] sm:$0xf]
    %v97 = vld [vmem:[%s3 + $0x4] sm:$0xf]
    %v98 = vld [vmem:[%s3 + $0x8] sm:$0xf]
    %v99 = vld [vmem:[%s3 + $0xc] sm:$0xf]
    %v100 = vld [vmem:[%s3 + $0x10] sm:$0xf]
    %v101 = vld [vmem:[%s3 + $0x14] sm:$0xf]
    %v102 = vld [vmem:[%s3 + $0x18] sm:$0xf]
    %v103 = vld [vmem:[%s3 + $0x1c] sm:$0xf]
    %v104 = vld [vmem:[%s4] sm:$0x1]
    %v106 = vlaneseq
    %v107 = vshrl.u32 %v106, 7
    %v108 = vsub.s32 0, %v107
    %v109 = vrot.slane %v104, %v108
    %v119 = vunpack.c.l.b16 %v96
    %v120 = vunpack.c.l.b16 %v97
    %v121 = vunpack.c.l.b16 %v98
    %v122 = vunpack.c.l.b16 %v99
    %v123 = vunpack.c.l.b16 %v100
    %v124 = vunpack.c.l.b16 %v101
    %v125 = vunpack.c.l.b16 %v102
    %v126 = vunpack.c.l.b16 %v103
    %v127 = vpack.c.b16 %v120, %v119
    %v128 = vpack.c.b16 %v122, %v121
    %v129 = vpack.c.b16 %v124, %v123
    %v130 = vpack.c.b16 %v126, %v125
    %vm135 = vcmask 523264
    %v137 = vsel %vm135, %v95, 0
    %139 = vmatprep.subr.bf16.mxu0 0
    %140 = vmatpush1.bf16.msra.mxu0 0
    %141 = vmatprep.subr.bf16.mxu0 0
    %142 = vmatpush1.bf16.msra.mxu0 0
    %143 = vmatprep.subr.bf16.mxu0 0
    %144 = vmatpush1.bf16.msra.mxu0 0
    %145 = vmatprep.subr.bf16.mxu0 0
    %146 = vmatpush1.bf16.msra.mxu0 0
    %147 = vmatprep.subr.bf16.mxu0 0
    %148 = vmatpush1.bf16.msra.mxu0 %v130
    %149 = vmatprep.subr.bf16.mxu0 0
    %150 = vmatpush1.bf16.msra.mxu0 %v129
    %151 = vmatprep.subr.bf16.mxu0 0
    %152 = vmatpush1.bf16.msra.mxu0 %v128
    %153 = vmatprep.subr.bf16.mxu0 0
    %154 = vmatpush1.bf16.msra.mxu0 %v127
    %155 = vmatprep.subr.bf16.mxu0 0
    %156 = vmatpush2.bf16.msra.mxu0 0
    %157 = vmatprep.subr.bf16.mxu0 0
    %158 = vmatpush2.bf16.msra.mxu0 0
    %159 = vmatprep.subr.bf16.mxu0 0
    %160 = vmatpush2.bf16.msra.mxu0 0
    %161 = vmatprep.subr.bf16.mxu0 0
    %162 = vmatpush2.bf16.msra.mxu0 0
    %163 = vmatprep.subr.bf16.mxu0 0
    %164 = vmatpush2.bf16.msra.mxu0 0
    %165 = vmatprep.subr.bf16.mxu0 0
    %166 = vmatpush2.bf16.msra.mxu0 0
    %167 = vmatprep.subr.bf16.mxu0 0
    %168 = vmatpush2.bf16.msra.mxu0 0
    %169 = vmatprep.subr.bf16.mxu0 0
    %170 = vmatpush2.bf16.msra.mxu0 0
    %171 = vmatprep.mubr.bf16.mxu0 0
    %172 = vmatmul.mubr.bf16.gmra.mxu0 %v137
    %v173 = vpop.f32.mrf.mxu0
    %v174 = vadd.f32 %v109, %v173
    %v175 = vpop.f32.mrf.mxu0
    %v176 = vpop.f32.mrf.mxu0
    %v177 = vadd.f32 %v109, %v176
    %v178 = vpop.f32.mrf.mxu0
    %179 = vdwg.mxu0
    %180 = vst.msk [vmem:[#allocation2] sm:$0xff] %vm48, %v174
    %181 = vst.msk [vmem:[#allocation2 + $0x8] sm:$0xff] %vm48, %v177
    // Predicated region
    $region22: #{tpu_custom_call.1} parent=1 // pred_check
      _
    $region23: #{tpu_custom_call.1} parent=1 // pred_check_branch
      %183 = sbr.rel (0) target = $region25
    $region24: #{tpu_custom_call.1} parent=1 // pred_region
      %s185 = ssub.s32 256, 256
      %186 = vsyncadd [#allocation3], %s185
      %s187 = sshll.u32 [#allocation2], 4
      %s188 = int_to_ptr.vmem [resolvable:$true] %s187
      %193 = dma.vmem_to_hbm [thread:$0]  %s188, 256, %s5, [#allocation3], 128, 128, 8
    $region25: #{tpu_custom_call.1} parent=1 // pred_fallthru
      _
    // Predicated region
    $region26: #{tpu_custom_call.1} parent=1 // pred_check
      _
    $region27: #{tpu_custom_call.1} parent=1 // pred_check_branch
      %195 = sbr.rel (0) target = $region29
    $region28: #{tpu_custom_call.1} parent=1 // pred_region
      %196 = dma.done [#allocation3], 256
    $region29: #{tpu_custom_call.1} parent=1 // pred_fallthru
      _
    %197 = vsyncpa [#allocation3], 1

</llo_original>
